<compile_context>
chip_gen: v5e
topology: v5e:2x2
jax: 0.10.0
libtpu: 0.0.40
codegen_flags: <defaults>
</compile_context>

<pallas_src>
import math
import functools

import jax
import jax.numpy as jnp
from jax.experimental import pallas as pl
from jax.experimental.pallas import tpu as pltpu

# ---- module hyper-parameters (small, consistent with SelfAttention) ----
EMB = 32       # k (embedding dim)
HEADS = 4
SEQ_LEN = 8    # t
BATCH = 2      # b


# --------------------------------------------------------------------------
# One-time parameter packing ("module init" analog) -- off the forward path.
# --------------------------------------------------------------------------
def pack_self_attention_params(wq, wk, wv, wu, bu, *, heads=HEADS):
    """Pack per-head projection weights once.

    Inputs are (in_features, out_features) weights (y = x @ W) and bias (k,).

    Returns:
      wqkv : (3, heads, s, k)  per-head q/k/v slabs, contraction dim (k) last;
                               the q slab has 1/sqrt(k) pre-folded.
      wu_p : (heads, k, s)     per-head unifyheads slice, contraction dim (s) last.
      bu_p : (1, 1, k)         unifyheads bias.
    """
    k = wq.shape[0]
    s = k // heads
    scale = 1.0 / math.sqrt(float(k))          # module divides scores by sqrt(k)

    def per_head(w):                           # (k, k) -> (heads, s, k)
        return jnp.transpose(w.reshape(k, heads, s), (1, 2, 0))

    wqkv = jnp.stack([per_head(wq) * scale,    # scale folded into Wq
                      per_head(wk),
                      per_head(wv)], axis=0)   # (3, heads, s, k)
    wu_p = jnp.transpose(wu.reshape(heads, s, k), (0, 2, 1))   # (heads, k, s)
    bu_p = bu.reshape(1, 1, k)
    return wqkv, wu_p, bu_p


# --------------------------------------------------------------------------
# Pallas kernel: full SelfAttention forward for the whole batch, single call.
# --------------------------------------------------------------------------
def self_attention_kernel(x_ref, wqkv_ref, wu_ref, bu_ref, o_ref, *, batch, heads):
    """Fused SelfAttention forward.

    x_ref    : (b, t, k)           input (passed once, no per-head replication)
    wqkv_ref : (3, heads, s, k)    packed per-head q/k/v weights (q pre-scaled)
    wu_ref   : (heads, k, s)       per-head unifyheads slice (transposed)
    bu_ref   : (1, 1, k)           unifyheads bias
    o_ref    : (b, t, k)
    """
    b = batch
    x = x_ref[...].astype(jnp.float32)                       # (b, t, k)
    t, emb = x.shape[1], x.shape[2]
    bh = b * heads

    # Fuse (b, heads) -> bh with cheap VMEM-resident broadcasts + leading-dim
    # reshapes (no HBM replication, no lane/sublane relayout).
    x_bh = jnp.broadcast_to(x[:, None], (b, heads, t, emb)).reshape(bh, t, emb)

    def bcast_w(w):                                          # (heads, d0, d1) -> (bh, d0, d1)
        return jnp.broadcast_to(w[None], (b,) + w.shape).reshape((bh,) + w.shape[1:])

    wqkv = wqkv_ref[...]                                     # (3, heads, s, k)

    # q/k/v projections: leading-axis split of wqkv (no lane-axis slicing);
    # q is pre-scaled by 1/sqrt(k) via the packed weights.
    q = jnp.einsum('btk,bdk->btd', x_bh, bcast_w(wqkv[0]),
                   preferred_element_type=jnp.float32)       # (bh, t, s)
    k = jnp.einsum('btk,bdk->btd', x_bh, bcast_w(wqkv[1]),
                   preferred_element_type=jnp.float32)       # (bh, t, s)
    v = jnp.einsum('btk,bdk->btd', x_bh, bcast_w(wqkv[2]),
                   preferred_element_type=jnp.float32)       # (bh, t, s)

    # scaled-dot-product attention, batched over (b*heads); mask=False.
    dot = jnp.einsum('bqd,bkd->bqk', q, k,
                     preferred_element_type=jnp.float32)     # (bh, t, t), already scaled
    m = jnp.max(dot, axis=-1, keepdims=True)
    p = jnp.exp(dot - m)
    p = p * pl.reciprocal(jnp.sum(p, axis=-1, keepdims=True), approx=False)
    av = jnp.einsum('bqk,bkd->bqd', p, v,
                    preferred_element_type=jnp.float32)      # (bh, t, s)

    # unifyheads folded per head: head h contributes av_h @ Wu[h*s:(h+1)*s, :];
    # the concat never materializes.
    contrib = jnp.einsum('btd,bkd->btk', av, bcast_w(wu_ref[...]),
                         preferred_element_type=jnp.float32)  # (bh, t, k)
    c4 = contrib.reshape(b, heads, t, emb)                    # leading-dim split only

    out = c4[:, 0]
    for h in range(1, heads):                                 # statically-unrolled head sum
        out = out + c4[:, h]
    out = out + bu_ref[...]

    o_ref[...] = out.astype(o_ref.dtype)


def self_attention_packed(x, wqkv, wu_p, bu_p, *, heads=HEADS):
    """Forward pass on pre-packed parameters (the per-call hot path)."""
    b, t, k = x.shape
    vmem = pl.BlockSpec(memory_space=pltpu.MemorySpace.VMEM)
    return pl.pallas_call(
        functools.partial(self_attention_kernel, batch=b, heads=heads),
        out_shape=jax.ShapeDtypeStruct((b, t, k), x.dtype),
        in_specs=[vmem, vmem, vmem, vmem],
        out_specs=vmem,
    )(x, wqkv, wu_p, bu_p)


def self_attention(x, wq, wk, wv, wu, bu, *, heads=HEADS):
    """Convenience wrapper taking raw (in, out)-layout weights."""
    return self_attention_packed(
        x, *pack_self_attention_params(wq, wk, wv, wu, bu, heads=heads), heads=heads)


# --------------------------------------------------------------------------
# pure-JAX reference (mirrors the PyTorch module line-by-line) for verification
# --------------------------------------------------------------------------
def ref_self_attention(x, wq, wk, wv, wu, bu, heads=HEADS):
    b, t, k = x.shape
    s = k // heads
    q = x @ wq
    ke = x @ wk
    v = x @ wv
    q = q.reshape(b, t, heads, s).transpose(0, 2, 1, 3).reshape(b * heads, t, s)
    ke = ke.reshape(b, t, heads, s).transpose(0, 2, 1, 3).reshape(b * heads, t, s)
    v = v.reshape(b, t, heads, s).transpose(0, 2, 1, 3).reshape(b * heads, t, s)
    dot = jnp.matmul(q, jnp.swapaxes(ke, 1, 2)) / math.sqrt(float(k))
    dot = jax.nn.softmax(dot, axis=2)
    out = jnp.matmul(dot, v).reshape(b, heads, t, s).transpose(0, 2, 1, 3).reshape(b, t, k)
    return out @ wu + bu


if __name__ == "__main__":
    keys = jax.random.split(jax.random.PRNGKey(0), 6)
    bound = 1.0 / math.sqrt(EMB)   # PyTorch nn.Linear default init range

    x = jax.random.normal(keys[0], (BATCH, SEQ_LEN, EMB), jnp.float32)
    wq = jax.random.uniform(keys[1], (EMB, EMB), jnp.float32, -bound, bound)
    wk = jax.random.uniform(keys[2], (EMB, EMB), jnp.float32, -bound, bound)
    wv = jax.random.uniform(keys[3], (EMB, EMB), jnp.float32, -bound, bound)
    wu = jax.random.uniform(keys[4], (EMB, EMB), jnp.float32, -bound, bound)
    bu = jax.random.uniform(keys[5], (EMB,), jnp.float32, -bound, bound)

    # "Module init": one-time packing, hoisted off the per-call forward path.
    wqkv_p, wu_p, bu_p = pack_self_attention_params(wq, wk, wv, wu, bu, heads=HEADS)

    fwd = jax.jit(functools.partial(self_attention_packed, heads=HEADS))
    out = jax.block_until_ready(fwd(x, wqkv_p, wu_p, bu_p))

    ref = ref_self_attention(x, wq, wk, wv, wu, bu, HEADS)
    assert out.shape == (BATCH, SEQ_LEN, EMB), out.shape
    assert jnp.allclose(out, ref, atol=1e-3, rtol=1e-3), (out, ref)
    print("KERNEL_OK")
</pallas_src>

<mosaic_0001>
module attributes {stable_mosaic.version = 11 : i64} {
  func.func @self_attention_kernel(%arg0: memref<2x8x32xf32, #tpu.memory_space<vmem>>, %arg1: memref<3x4x8x32xf32, #tpu.memory_space<vmem>>, %arg2: memref<4x32x8xf32, #tpu.memory_space<vmem>>, %arg3: memref<1x1x32xf32, #tpu.memory_space<vmem>>, %arg4: memref<2x8x32xf32, #tpu.memory_space<vmem>>) attributes {dimension_semantics = [], scalar_prefetch = 0 : i64, scratch_operands = 0 : i64, tpu.core_type = #tpu.core_type<tc>} {
    %c0 = arith.constant 0 : index
    %c0_0 = arith.constant 0 : index
    %c0_1 = arith.constant 0 : index
    %0 = vector.load %arg0[%c0, %c0_0, %c0_1] : memref<2x8x32xf32, #tpu.memory_space<vmem>>, vector<2x8x32xf32>
    %1 = vector.shape_cast %0 : vector<2x8x32xf32> to vector<2x1x8x32xf32>
    %2 = vector.shape_cast %1 : vector<2x1x8x32xf32> to vector<2x1x8x32xf32>
    %3 = vector.broadcast %2 : vector<2x1x8x32xf32> to vector<2x4x8x32xf32>
    %4 = vector.shape_cast %3 : vector<2x4x8x32xf32> to vector<8x8x32xf32>
    %c0_2 = arith.constant 0 : index
    %c0_3 = arith.constant 0 : index
    %c0_4 = arith.constant 0 : index
    %c0_5 = arith.constant 0 : index
    %5 = vector.load %arg1[%c0_2, %c0_3, %c0_4, %c0_5] : memref<3x4x8x32xf32, #tpu.memory_space<vmem>>, vector<3x4x8x32xf32>
    %6 = vector.extract_strided_slice %5 {offsets = [0, 0, 0, 0], sizes = [1, 4, 8, 32], strides = [1, 1, 1, 1]} : vector<3x4x8x32xf32> to vector<1x4x8x32xf32>
    %7 = vector.shape_cast %6 : vector<1x4x8x32xf32> to vector<4x8x32xf32>
    %8 = vector.shape_cast %7 : vector<4x8x32xf32> to vector<1x4x8x32xf32>
    %9 = vector.shape_cast %8 : vector<1x4x8x32xf32> to vector<1x4x8x32xf32>
    %10 = vector.broadcast %9 : vector<1x4x8x32xf32> to vector<2x4x8x32xf32>
    %11 = vector.shape_cast %10 : vector<2x4x8x32xf32> to vector<8x8x32xf32>
    "tpu.trace_start"() <{level = 10 : i32, message = "btk,bdk->btd"}> : () -> ()
    %cst = arith.constant dense<0.000000e+00> : vector<8x8x8xf32>
    %12 = tpu.matmul %4, %11, %cst {dimension_numbers = #tpu.dot_dimension_numbers<[2], [2], [1], [1], [0, 0, 0, 1, 1, 1], [0], [0]>} : vector<8x8x32xf32>, vector<8x8x32xf32>, vector<8x8x8xf32> -> vector<8x8x8xf32>
    "tpu.trace_stop"() : () -> ()
    %13 = vector.extract_strided_slice %5 {offsets = [1, 0, 0, 0], sizes = [1, 4, 8, 32], strides = [1, 1, 1, 1]} : vector<3x4x8x32xf32> to vector<1x4x8x32xf32>
    %14 = vector.shape_cast %13 : vector<1x4x8x32xf32> to vector<4x8x32xf32>
    %15 = vector.shape_cast %14 : vector<4x8x32xf32> to vector<1x4x8x32xf32>
    %16 = vector.shape_cast %15 : vector<1x4x8x32xf32> to vector<1x4x8x32xf32>
    %17 = vector.broadcast %16 : vector<1x4x8x32xf32> to vector<2x4x8x32xf32>
    %18 = vector.shape_cast %17 : vector<2x4x8x32xf32> to vector<8x8x32xf32>
    "tpu.trace_start"() <{level = 10 : i32, message = "btk,bdk->btd"}> : () -> ()
    %cst_6 = arith.constant dense<0.000000e+00> : vector<8x8x8xf32>
    %19 = tpu.matmul %4, %18, %cst_6 {dimension_numbers = #tpu.dot_dimension_numbers<[2], [2], [1], [1], [0, 0, 0, 1, 1, 1], [0], [0]>} : vector<8x8x32xf32>, vector<8x8x32xf32>, vector<8x8x8xf32> -> vector<8x8x8xf32>
    "tpu.trace_stop"() : () -> ()
    %20 = vector.extract_strided_slice %5 {offsets = [2, 0, 0, 0], sizes = [1, 4, 8, 32], strides = [1, 1, 1, 1]} : vector<3x4x8x32xf32> to vector<1x4x8x32xf32>
    %21 = vector.shape_cast %20 : vector<1x4x8x32xf32> to vector<4x8x32xf32>
    %22 = vector.shape_cast %21 : vector<4x8x32xf32> to vector<1x4x8x32xf32>
    %23 = vector.shape_cast %22 : vector<1x4x8x32xf32> to vector<1x4x8x32xf32>
    %24 = vector.broadcast %23 : vector<1x4x8x32xf32> to vector<2x4x8x32xf32>
    %25 = vector.shape_cast %24 : vector<2x4x8x32xf32> to vector<8x8x32xf32>
    "tpu.trace_start"() <{level = 10 : i32, message = "btk,bdk->btd"}> : () -> ()
    %cst_7 = arith.constant dense<0.000000e+00> : vector<8x8x8xf32>
    %26 = tpu.matmul %4, %25, %cst_7 {dimension_numbers = #tpu.dot_dimension_numbers<[2], [2], [1], [1], [0, 0, 0, 1, 1, 1], [0], [0]>} : vector<8x8x32xf32>, vector<8x8x32xf32>, vector<8x8x8xf32> -> vector<8x8x8xf32>
    "tpu.trace_stop"() : () -> ()
    "tpu.trace_start"() <{level = 10 : i32, message = "bqd,bkd->bqk"}> : () -> ()
    %cst_8 = arith.constant dense<0.000000e+00> : vector<8x8x8xf32>
    %27 = tpu.matmul %12, %19, %cst_8 {dimension_numbers = #tpu.dot_dimension_numbers<[2], [2], [1], [1], [0, 0, 0, 1, 1, 1], [0], [0]>} : vector<8x8x8xf32>, vector<8x8x8xf32>, vector<8x8x8xf32> -> vector<8x8x8xf32>
    "tpu.trace_stop"() : () -> ()
    %cst_9 = arith.constant dense<0xFF800000> : vector<8x8xf32>
    %28 = vector.multi_reduction <maximumf>, %27, %cst_9 [2] : vector<8x8x8xf32> to vector<8x8xf32>
    %29 = vector.shape_cast %28 : vector<8x8xf32> to vector<8x8x1xf32>
    %30 = vector.broadcast %29 : vector<8x8x1xf32> to vector<8x8x8xf32>
    %31 = arith.subf %27, %30 : vector<8x8x8xf32>
    %32 = math.exp %31 : vector<8x8x8xf32>
    %cst_10 = arith.constant dense<0.000000e+00> : vector<8x8xf32>
    %33 = vector.multi_reduction <add>, %32, %cst_10 [2] : vector<8x8x8xf32> to vector<8x8xf32>
    %34 = vector.shape_cast %33 : vector<8x8xf32> to vector<8x8x1xf32>
    %35 = tpu.reciprocal %34 : vector<8x8x1xf32> -> vector<8x8x1xf32>
    %36 = vector.broadcast %35 : vector<8x8x1xf32> to vector<8x8x8xf32>
    %37 = arith.mulf %32, %36 : vector<8x8x8xf32>
    "tpu.trace_start"() <{level = 10 : i32, message = "bqk,bkd->bqd"}> : () -> ()
    %cst_11 = arith.constant dense<0.000000e+00> : vector<8x8x8xf32>
    %38 = tpu.matmul %37, %26, %cst_11 {dimension_numbers = #tpu.dot_dimension_numbers<[2], [1], [1], [2], [0, 0, 0, 1, 1, 2], [0], [0]>} : vector<8x8x8xf32>, vector<8x8x8xf32>, vector<8x8x8xf32> -> vector<8x8x8xf32>
    "tpu.trace_stop"() : () -> ()
    %c0_12 = arith.constant 0 : index
    %c0_13 = arith.constant 0 : index
    %c0_14 = arith.constant 0 : index
    %39 = vector.load %arg2[%c0_12, %c0_13, %c0_14] : memref<4x32x8xf32, #tpu.memory_space<vmem>>, vector<4x32x8xf32>
    %40 = vector.shape_cast %39 : vector<4x32x8xf32> to vector<1x4x32x8xf32>
    %41 = vector.shape_cast %40 : vector<1x4x32x8xf32> to vector<1x4x32x8xf32>
    %42 = vector.broadcast %41 : vector<1x4x32x8xf32> to vector<2x4x32x8xf32>
    %43 = vector.shape_cast %42 : vector<2x4x32x8xf32> to vector<8x32x8xf32>
    "tpu.trace_start"() <{level = 10 : i32, message = "btd,bkd->btk"}> : () -> ()
    %cst_15 = arith.constant dense<0.000000e+00> : vector<8x8x32xf32>
    %44 = tpu.matmul %38, %43, %cst_15 {dimension_numbers = #tpu.dot_dimension_numbers<[2], [2], [1], [1], [0, 0, 0, 1, 1, 1], [0], [0]>} : vector<8x8x8xf32>, vector<8x32x8xf32>, vector<8x8x32xf32> -> vector<8x8x32xf32>
    "tpu.trace_stop"() : () -> ()
    %45 = vector.shape_cast %44 : vector<8x8x32xf32> to vector<2x4x8x32xf32>
    %46 = vector.extract_strided_slice %45 {offsets = [0, 0, 0, 0], sizes = [2, 1, 8, 32], strides = [1, 1, 1, 1]} : vector<2x4x8x32xf32> to vector<2x1x8x32xf32>
    %47 = vector.shape_cast %46 : vector<2x1x8x32xf32> to vector<2x8x32xf32>
    %48 = vector.extract_strided_slice %45 {offsets = [0, 1, 0, 0], sizes = [2, 1, 8, 32], strides = [1, 1, 1, 1]} : vector<2x4x8x32xf32> to vector<2x1x8x32xf32>
    %49 = vector.shape_cast %48 : vector<2x1x8x32xf32> to vector<2x8x32xf32>
    %50 = arith.addf %47, %49 : vector<2x8x32xf32>
    %51 = vector.extract_strided_slice %45 {offsets = [0, 2, 0, 0], sizes = [2, 1, 8, 32], strides = [1, 1, 1, 1]} : vector<2x4x8x32xf32> to vector<2x1x8x32xf32>
    %52 = vector.shape_cast %51 : vector<2x1x8x32xf32> to vector<2x8x32xf32>
    %53 = arith.addf %50, %52 : vector<2x8x32xf32>
    %54 = vector.extract_strided_slice %45 {offsets = [0, 3, 0, 0], sizes = [2, 1, 8, 32], strides = [1, 1, 1, 1]} : vector<2x4x8x32xf32> to vector<2x1x8x32xf32>
    %55 = vector.shape_cast %54 : vector<2x1x8x32xf32> to vector<2x8x32xf32>
    %56 = arith.addf %53, %55 : vector<2x8x32xf32>
    %c0_16 = arith.constant 0 : index
    %c0_17 = arith.constant 0 : index
    %c0_18 = arith.constant 0 : index
    %57 = vector.load %arg3[%c0_16, %c0_17, %c0_18] : memref<1x1x32xf32, #tpu.memory_space<vmem>>, vector<1x1x32xf32>
    %58 = vector.broadcast %57 : vector<1x1x32xf32> to vector<2x8x32xf32>
    %59 = arith.addf %56, %58 : vector<2x8x32xf32>
    %c0_19 = arith.constant 0 : index
    %c0_20 = arith.constant 0 : index
    %c0_21 = arith.constant 0 : index
    %60 = vector.load %arg4[%c0_19, %c0_20, %c0_21] : memref<2x8x32xf32, #tpu.memory_space<vmem>>, vector<2x8x32xf32>
    tpu.vector_store %arg4[%c0_19, %c0_20, %c0_21], %59 {strides = array<i32>} : memref<2x8x32xf32, #tpu.memory_space<vmem>>, vector<2x8x32xf32>,
    return
  }
}

</mosaic_0001>

<llo_original>
// kernel: self_attention_packed.1
$region0: #{self_attention_packed.1}
  #allocation0 [shape = 'u32[]', space=smem, size = 0x4, offset = 0x4, fixed_abs, tag = 'smem constant byte address 0x4 - core index']
  #allocation1 [shape = 'u32[72,128]{1,0:T(1,128)}', space=vmem, size = 0x9000, scoped, tag = 'internal scratch']
  %s0 = inlined_call_operand.vmem [shape: f32[2,8,32], index: 0, kind: input, shape index: {}]
  %s1 = inlined_call_operand.vmem [shape: f32[3,4,8,32], index: 1, kind: input, shape index: {}]
  %s2 = inlined_call_operand.vmem [shape: f32[4,32,8], index: 2, kind: input, shape index: {}]
  %s3 = inlined_call_operand.vmem [shape: f32[1,1,32], index: 3, kind: input, shape index: {}]
  %s4 = inlined_call_operand.hbm [shape: f32[2,8,32], index: 4, kind: output, shape index: {}]
  %s5 = sld [smem:[#allocation0]]
  $region26: #{self_attention_packed.1} parent=0
    _
  %s7 = ssub.s32 1, %s5
  %s8 = scalar_select 0, %s7, %s5
  $region1: #{self_attention_packed.1} parent=0
    #allocation2 [shape = 'u8[8192]{0}', space=vmem, size = 0x2000, scoped, tag = 'output window, operand 0, single buffered']
    #allocation3 [shape = 's32[1]{0}', space=sflag, size = 0x4, scoped, tag = 'scoped memory for self_attention_packed.1']
    %9 = vsyncpa [#allocation3], 0
    // Predicated region
    $region2: #{self_attention_packed.1} parent=1 // pred_check
      _
    $region3: #{self_attention_packed.1} parent=1 // pred_check_branch
      %11 = sbr.rel (0) target = $region5
    $region4: #{self_attention_packed.1} parent=1 // pred_region
      _
    $region5: #{self_attention_packed.1} parent=1 // pred_fallthru
      _
    // Predicated region
    $region6: #{self_attention_packed.1} parent=1 // pred_check
      _
    $region7: #{self_attention_packed.1} parent=1 // pred_check_branch
      %13 = sbr.rel (0) target = $region9
    $region8: #{self_attention_packed.1} parent=1 // pred_region
      _
    $region9: #{self_attention_packed.1} parent=1 // pred_fallthru
      _
    // Predicated region
    $region10: #{self_attention_packed.1} parent=1 // pred_check
      _
    $region11: #{self_attention_packed.1} parent=1 // pred_check_branch
      %15 = sbr.rel (0) target = $region13
    $region12: #{self_attention_packed.1} parent=1 // pred_region
      _
    $region13: #{self_attention_packed.1} parent=1 // pred_fallthru
      _
    // Predicated region
    $region14: #{self_attention_packed.1} parent=1 // pred_check
      _
    $region15: #{self_attention_packed.1} parent=1 // pred_check_branch
      %17 = sbr.rel (0) target = $region17
    $region16: #{self_attention_packed.1} parent=1 // pred_region
      _
    $region17: #{self_attention_packed.1} parent=1 // pred_fallthru
      _
    %v18 = vld [vmem:[%s0] sm:$0xff]
    %v19 = vld [vmem:[%s0 + $0x8] sm:$0xff]
    %v20 = vld [vmem:[%s1] sm:$0xff]
    %v21 = vld [vmem:[%s1 + $0x8] sm:$0xff]
    %v22 = vld [vmem:[%s1 + $0x10] sm:$0xff]
    %v23 = vld [vmem:[%s1 + $0x18] sm:$0xff]
    %v24 = vld [vmem:[%s1 + $0x20] sm:$0xff]
    %v25 = vld [vmem:[%s1 + $0x28] sm:$0xff]
    %v26 = vld [vmem:[%s1 + $0x30] sm:$0xff]
    %v27 = vld [vmem:[%s1 + $0x38] sm:$0xff]
    %v28 = vld [vmem:[%s1 + $0x40] sm:$0xff]
    %v29 = vld [vmem:[%s1 + $0x48] sm:$0xff]
    %v30 = vld [vmem:[%s1 + $0x50] sm:$0xff]
    %v31 = vld [vmem:[%s1 + $0x58] sm:$0xff]
    %vm32 = vcmask 261120
    %v34 = vsel %vm32, %v18, 0
    %v37 = vsel %vm32, %v20, 0
    %39 = vmatpush.xpose.msra.mxu0 0.0
    %40 = vmatpush.xpose.msra.mxu0 0.0
    %41 = vmatpush.xpose.msra.mxu0 0.0
    %42 = vmatpush.xpose.msra.mxu0 0.0
    %43 = vmatpush.xpose.msra.mxu0 0.0
    %44 = vmatpush.xpose.msra.mxu0 0.0
    %45 = vmatpush.xpose.msra.mxu0 0.0
    %46 = vmatpush.xpose.msra.mxu0 0.0
    %47 = vmatpush.xpose.msra.mxu0 0.0
    %48 = vmatpush.xpose.msra.mxu0 0.0
    %49 = vmatpush.xpose.msra.mxu0 0.0
    %50 = vmatpush.xpose.msra.mxu0 0.0
    %51 = vmatpush.xpose.msra.mxu0 0.0
    %52 = vmatpush.xpose.msra.mxu0 0.0
    %53 = vmatpush.xpose.msra.mxu0 0.0
    %54 = vmatpush.xpose.msra.mxu0 %v37
    %55 = vmatmul.f32.gmra.mxu0 %v34
    %v56 = vpop.f32.mrf.mxu0
    %v57 = vadd.f32 0.0, %v56
    %58 = vdwg.mxu0
    %v60 = vsel %vm32, %v21, 0
    %62 = vmatpush.xpose.msra.mxu0 0.0
    %63 = vmatpush.xpose.msra.mxu0 0.0
    %64 = vmatpush.xpose.msra.mxu0 0.0
    %65 = vmatpush.xpose.msra.mxu0 0.0
    %66 = vmatpush.xpose.msra.mxu0 0.0
    %67 = vmatpush.xpose.msra.mxu0 0.0
    %68 = vmatpush.xpose.msra.mxu0 0.0
    %69 = vmatpush.xpose.msra.mxu0 0.0
    %70 = vmatpush.xpose.msra.mxu0 0.0
    %71 = vmatpush.xpose.msra.mxu0 0.0
    %72 = vmatpush.xpose.msra.mxu0 0.0
    %73 = vmatpush.xpose.msra.mxu0 0.0
    %74 = vmatpush.xpose.msra.mxu0 0.0
    %75 = vmatpush.xpose.msra.mxu0 0.0
    %76 = vmatpush.xpose.msra.mxu0 0.0
    %77 = vmatpush.xpose.msra.mxu0 %v60
    %78 = vmatmul.f32.gmra.mxu0 %v34
    %v79 = vpop.f32.mrf.mxu0
    %v80 = vadd.f32 0.0, %v79
    %81 = vdwg.mxu0
    %v83 = vsel %vm32, %v22, 0
    %85 = vmatpush.xpose.msra.mxu0 0.0
    %86 = vmatpush.xpose.msra.mxu0 0.0
    %87 = vmatpush.xpose.msra.mxu0 0.0
    %88 = vmatpush.xpose.msra.mxu0 0.0
    %89 = vmatpush.xpose.msra.mxu0 0.0
    %90 = vmatpush.xpose.msra.mxu0 0.0
    %91 = vmatpush.xpose.msra.mxu0 0.0
    %92 = vmatpush.xpose.msra.mxu0 0.0
    %93 = vmatpush.xpose.msra.mxu0 0.0
    %94 = vmatpush.xpose.msra.mxu0 0.0
    %95 = vmatpush.xpose.msra.mxu0 0.0
    %96 = vmatpush.xpose.msra.mxu0 0.0
    %97 = vmatpush.xpose.msra.mxu0 0.0
    %98 = vmatpush.xpose.msra.mxu0 0.0
    %99 = vmatpush.xpose.msra.mxu0 0.0
    %100 = vmatpush.xpose.msra.mxu0 %v83
    %101 = vmatmul.f32.gmra.mxu0 %v34
    %v102 = vpop.f32.mrf.mxu0
    %v103 = vadd.f32 0.0, %v102
    %104 = vdwg.mxu0
    %v106 = vsel %vm32, %v23, 0
    %108 = vmatpush.xpose.msra.mxu0 0.0
    %109 = vmatpush.xpose.msra.mxu0 0.0
    %110 = vmatpush.xpose.msra.mxu0 0.0
    %111 = vmatpush.xpose.msra.mxu0 0.0
    %112 = vmatpush.xpose.msra.mxu0 0.0
    %113 = vmatpush.xpose.msra.mxu0 0.0
    %114 = vmatpush.xpose.msra.mxu0 0.0
    %115 = vmatpush.xpose.msra.mxu0 0.0
    %116 = vmatpush.xpose.msra.mxu0 0.0
    %117 = vmatpush.xpose.msra.mxu0 0.0
    %118 = vmatpush.xpose.msra.mxu0 0.0
    %119 = vmatpush.xpose.msra.mxu0 0.0
    %120 = vmatpush.xpose.msra.mxu0 0.0
    %121 = vmatpush.xpose.msra.mxu0 0.0
    %122 = vmatpush.xpose.msra.mxu0 0.0
    %123 = vmatpush.xpose.msra.mxu0 %v106
    %124 = vmatmul.f32.gmra.mxu0 %v34
    %v125 = vpop.f32.mrf.mxu0
    %v126 = vadd.f32 0.0, %v125
    %127 = vdwg.mxu0
    %v129 = vsel %vm32, %v19, 0
    %131 = vmatpush.xpose.msra.mxu0 0.0
    %132 = vmatpush.xpose.msra.mxu0 0.0
    %133 = vmatpush.xpose.msra.mxu0 0.0
    %134 = vmatpush.xpose.msra.mxu0 0.0
    %135 = vmatpush.xpose.msra.mxu0 0.0
    %136 = vmatpush.xpose.msra.mxu0 0.0
    %137 = vmatpush.xpose.msra.mxu0 0.0
    %138 = vmatpush.xpose.msra.mxu0 0.0
    %139 = vmatpush.xpose.msra.mxu0 0.0
    %140 = vmatpush.xpose.msra.mxu0 0.0
    %141 = vmatpush.xpose.msra.mxu0 0.0
    %142 = vmatpush.xpose.msra.mxu0 0.0
    %143 = vmatpush.xpose.msra.mxu0 0.0
    %144 = vmatpush.xpose.msra.mxu0 0.0
    %145 = vmatpush.xpose.msra.mxu0 0.0
    %146 = vmatpush.xpose.msra.mxu0 %v37
    %147 = vmatmul.f32.gmra.mxu0 %v129
    %v148 = vpop.f32.mrf.mxu0
    %v149 = vadd.f32 0.0, %v148
    %150 = vdwg.mxu0
    %151 = vmatpush.xpose.msra.mxu0 0.0
    %152 = vmatpush.xpose.msra.mxu0 0.0
    %153 = vmatpush.xpose.msra.mxu0 0.0
    %154 = vmatpush.xpose.msra.mxu0 0.0
    %155 = vmatpush.xpose.msra.mxu0 0.0
    %156 = vmatpush.xpose.msra.mxu0 0.0
    %157 = vmatpush.xpose.msra.mxu0 0.0
    %158 = vmatpush.xpose.msra.mxu0 0.0
    %159 = vmatpush.xpose.msra.mxu0 0.0
    %160 = vmatpush.xpose.msra.mxu0 0.0
    %161 = vmatpush.xpose.msra.mxu0 0.0
    %162 = vmatpush.xpose.msra.mxu0 0.0
    %163 = vmatpush.xpose.msra.mxu0 0.0
    %164 = vmatpush.xpose.msra.mxu0 0.0
    %165 = vmatpush.xpose.msra.mxu0 0.0
    %166 = vmatpush.xpose.msra.mxu0 %v60
    %167 = vmatmul.f32.gmra.mxu0 %v129
    %v168 = vpop.f32.mrf.mxu0
    %v169 = vadd.f32 0.0, %v168
    %170 = vdwg.mxu0
    %171 = vmatpush.xpose.msra.mxu0 0.0
    %172 = vmatpush.xpose.msra.mxu0 0.0
    %173 = vmatpush.xpose.msra.mxu0 0.0
    %174 = vmatpush.xpose.msra.mxu0 0.0
    %175 = vmatpush.xpose.msra.mxu0 0.0
    %176 = vmatpush.xpose.msra.mxu0 0.0
    %177 = vmatpush.xpose.msra.mxu0 0.0
    %178 = vmatpush.xpose.msra.mxu0 0.0
    %179 = vmatpush.xpose.msra.mxu0 0.0
    %180 = vmatpush.xpose.msra.mxu0 0.0
    %181 = vmatpush.xpose.msra.mxu0 0.0
    %182 = vmatpush.xpose.msra.mxu0 0.0
    %183 = vmatpush.xpose.msra.mxu0 0.0
    %184 = vmatpush.xpose.msra.mxu0 0.0
    %185 = vmatpush.xpose.msra.mxu0 0.0
    %186 = vmatpush.xpose.msra.mxu0 %v83
    %187 = vmatmul.f32.gmra.mxu0 %v129
    %v188 = vpop.f32.mrf.mxu0
    %v189 = vadd.f32 0.0, %v188
    %190 = vdwg.mxu0
    %191 = vmatpush.xpose.msra.mxu0 0.0
    %192 = vmatpush.xpose.msra.mxu0 0.0
    %193 = vmatpush.xpose.msra.mxu0 0.0
    %194 = vmatpush.xpose.msra.mxu0 0.0
    %195 = vmatpush.xpose.msra.mxu0 0.0
    %196 = vmatpush.xpose.msra.mxu0 0.0
    %197 = vmatpush.xpose.msra.mxu0 0.0
    %198 = vmatpush.xpose.msra.mxu0 0.0
    %199 = vmatpush.xpose.msra.mxu0 0.0
    %200 = vmatpush.xpose.msra.mxu0 0.0
    %201 = vmatpush.xpose.msra.mxu0 0.0
    %202 = vmatpush.xpose.msra.mxu0 0.0
    %203 = vmatpush.xpose.msra.mxu0 0.0
    %204 = vmatpush.xpose.msra.mxu0 0.0
    %205 = vmatpush.xpose.msra.mxu0 0.0
    %206 = vmatpush.xpose.msra.mxu0 %v106
    %207 = vmatmul.f32.gmra.mxu0 %v129
    %v208 = vpop.f32.mrf.mxu0
    %v209 = vadd.f32 0.0, %v208
    %210 = vdwg.mxu0
    %v212 = vsel %vm32, %v24, 0
    %214 = vmatpush.xpose.msra.mxu0 0.0
    %215 = vmatpush.xpose.msra.mxu0 0.0
    %216 = vmatpush.xpose.msra.mxu0 0.0
    %217 = vmatpush.xpose.msra.mxu0 0.0
    %218 = vmatpush.xpose.msra.mxu0 0.0
    %219 = vmatpush.xpose.msra.mxu0 0.0
    %220 = vmatpush.xpose.msra.mxu0 0.0
    %221 = vmatpush.xpose.msra.mxu0 0.0
    %222 = vmatpush.xpose.msra.mxu0 0.0
    %223 = vmatpush.xpose.msra.mxu0 0.0
    %224 = vmatpush.xpose.msra.mxu0 0.0
    %225 = vmatpush.xpose.msra.mxu0 0.0
    %226 = vmatpush.xpose.msra.mxu0 0.0
    %227 = vmatpush.xpose.msra.mxu0 0.0
    %228 = vmatpush.xpose.msra.mxu0 0.0
    %229 = vmatpush.xpose.msra.mxu0 %v212
    %230 = vmatmul.f32.gmra.mxu0 %v34
    %v231 = vpop.f32.mrf.mxu0
    %v232 = vadd.f32 0.0, %v231
    %233 = vdwg.mxu0
    %v235 = vsel %vm32, %v25, 0
    %237 = vmatpush.xpose.msra.mxu0 0.0
    %238 = vmatpush.xpose.msra.mxu0 0.0
    %239 = vmatpush.xpose.msra.mxu0 0.0
    %240 = vmatpush.xpose.msra.mxu0 0.0
    %241 = vmatpush.xpose.msra.mxu0 0.0
    %242 = vmatpush.xpose.msra.mxu0 0.0
    %243 = vmatpush.xpose.msra.mxu0 0.0
    %244 = vmatpush.xpose.msra.mxu0 0.0
    %245 = vmatpush.xpose.msra.mxu0 0.0
    %246 = vmatpush.xpose.msra.mxu0 0.0
    %247 = vmatpush.xpose.msra.mxu0 0.0
    %248 = vmatpush.xpose.msra.mxu0 0.0
    %249 = vmatpush.xpose.msra.mxu0 0.0
    %250 = vmatpush.xpose.msra.mxu0 0.0
    %251 = vmatpush.xpose.msra.mxu0 0.0
    %252 = vmatpush.xpose.msra.mxu0 %v235
    %253 = vmatmul.f32.gmra.mxu0 %v34
    %v254 = vpop.f32.mrf.mxu0
    %v255 = vadd.f32 0.0, %v254
    %256 = vdwg.mxu0
    %v258 = vsel %vm32, %v26, 0
    %260 = vmatpush.xpose.msra.mxu0 0.0
    %261 = vmatpush.xpose.msra.mxu0 0.0
    %262 = vmatpush.xpose.msra.mxu0 0.0
    %263 = vmatpush.xpose.msra.mxu0 0.0
    %264 = vmatpush.xpose.msra.mxu0 0.0
    %265 = vmatpush.xpose.msra.mxu0 0.0
    %266 = vmatpush.xpose.msra.mxu0 0.0
    %267 = vmatpush.xpose.msra.mxu0 0.0
    %268 = vmatpush.xpose.msra.mxu0 0.0
    %269 = vmatpush.xpose.msra.mxu0 0.0
    %270 = vmatpush.xpose.msra.mxu0 0.0
    %271 = vmatpush.xpose.msra.mxu0 0.0
    %272 = vmatpush.xpose.msra.mxu0 0.0
    %273 = vmatpush.xpose.msra.mxu0 0.0
    %274 = vmatpush.xpose.msra.mxu0 0.0
    %275 = vmatpush.xpose.msra.mxu0 %v258
    %276 = vmatmul.f32.gmra.mxu0 %v34
    %v277 = vpop.f32.mrf.mxu0
    %v278 = vadd.f32 0.0, %v277
    %279 = vdwg.mxu0
    %v281 = vsel %vm32, %v27, 0
    %283 = vmatpush.xpose.msra.mxu0 0.0
    %284 = vmatpush.xpose.msra.mxu0 0.0
    %285 = vmatpush.xpose.msra.mxu0 0.0
    %286 = vmatpush.xpose.msra.mxu0 0.0
    %287 = vmatpush.xpose.msra.mxu0 0.0
    %288 = vmatpush.xpose.msra.mxu0 0.0
    %289 = vmatpush.xpose.msra.mxu0 0.0
    %290 = vmatpush.xpose.msra.mxu0 0.0
    %291 = vmatpush.xpose.msra.mxu0 0.0
    %292 = vmatpush.xpose.msra.mxu0 0.0
    %293 = vmatpush.xpose.msra.mxu0 0.0
    %294 = vmatpush.xpose.msra.mxu0 0.0
    %295 = vmatpush.xpose.msra.mxu0 0.0
    %296 = vmatpush.xpose.msra.mxu0 0.0
    %297 = vmatpush.xpose.msra.mxu0 0.0
    %298 = vmatpush.xpose.msra.mxu0 %v281
    %299 = vmatmul.f32.gmra.mxu0 %v34
    %v300 = vpop.f32.mrf.mxu0
    %v301 = vadd.f32 0.0, %v300
    %302 = vdwg.mxu0
    %303 = vmatpush.xpose.msra.mxu0 0.0
    %304 = vmatpush.xpose.msra.mxu0 0.0
    %305 = vmatpush.xpose.msra.mxu0 0.0
    %306 = vmatpush.xpose.msra.mxu0 0.0
    %307 = vmatpush.xpose.msra.mxu0 0.0
    %308 = vmatpush.xpose.msra.mxu0 0.0
    %309 = vmatpush.xpose.msra.mxu0 0.0
    %310 = vmatpush.xpose.msra.mxu0 0.0
    %311 = vmatpush.xpose.msra.mxu0 0.0
    %312 = vmatpush.xpose.msra.mxu0 0.0
    %313 = vmatpush.xpose.msra.mxu0 0.0
    %314 = vmatpush.xpose.msra.mxu0 0.0
    %315 = vmatpush.xpose.msra.mxu0 0.0
    %316 = vmatpush.xpose.msra.mxu0 0.0
    %317 = vmatpush.xpose.msra.mxu0 0.0
    %318 = vmatpush.xpose.msra.mxu0 %v212
    %319 = vmatmul.f32.gmra.mxu0 %v129
    %v320 = vpop.f32.mrf.mxu0
    %v321 = vadd.f32 0.0, %v320
    %322 = vdwg.mxu0
    %323 = vmatpush.xpose.msra.mxu0 0.0
    %324 = vmatpush.xpose.msra.mxu0 0.0
    %325 = vmatpush.xpose.msra.mxu0 0.0
    %326 = vmatpush.xpose.msra.mxu0 0.0
    %327 = vmatpush.xpose.msra.mxu0 0.0
    %328 = vmatpush.xpose.msra.mxu0 0.0
    %329 = vmatpush.xpose.msra.mxu0 0.0
    %330 = vmatpush.xpose.msra.mxu0 0.0
    %331 = vmatpush.xpose.msra.mxu0 0.0
    %332 = vmatpush.xpose.msra.mxu0 0.0
    %333 = vmatpush.xpose.msra.mxu0 0.0
    %334 = vmatpush.xpose.msra.mxu0 0.0
    %335 = vmatpush.xpose.msra.mxu0 0.0
    %336 = vmatpush.xpose.msra.mxu0 0.0
    %337 = vmatpush.xpose.msra.mxu0 0.0
    %338 = vmatpush.xpose.msra.mxu0 %v235
    %339 = vmatmul.f32.gmra.mxu0 %v129
    %v340 = vpop.f32.mrf.mxu0
    %v341 = vadd.f32 0.0, %v340
    %342 = vdwg.mxu0
    %343 = vmatpush.xpose.msra.mxu0 0.0
    %344 = vmatpush.xpose.msra.mxu0 0.0
    %345 = vmatpush.xpose.msra.mxu0 0.0
    %346 = vmatpush.xpose.msra.mxu0 0.0
    %347 = vmatpush.xpose.msra.mxu0 0.0
    %348 = vmatpush.xpose.msra.mxu0 0.0
    %349 = vmatpush.xpose.msra.mxu0 0.0
    %350 = vmatpush.xpose.msra.mxu0 0.0
    %351 = vmatpush.xpose.msra.mxu0 0.0
    %352 = vmatpush.xpose.msra.mxu0 0.0
    %353 = vmatpush.xpose.msra.mxu0 0.0
    %354 = vmatpush.xpose.msra.mxu0 0.0
    %355 = vmatpush.xpose.msra.mxu0 0.0
    %356 = vmatpush.xpose.msra.mxu0 0.0
    %357 = vmatpush.xpose.msra.mxu0 0.0
    %358 = vmatpush.xpose.msra.mxu0 %v258
    %359 = vmatmul.f32.gmra.mxu0 %v129
    %v360 = vpop.f32.mrf.mxu0
    %v361 = vadd.f32 0.0, %v360
    %362 = vdwg.mxu0
    %363 = vmatpush.xpose.msra.mxu0 0.0
    %364 = vmatpush.xpose.msra.mxu0 0.0
    %365 = vmatpush.xpose.msra.mxu0 0.0
    %366 = vmatpush.xpose.msra.mxu0 0.0
    %367 = vmatpush.xpose.msra.mxu0 0.0
    %368 = vmatpush.xpose.msra.mxu0 0.0
    %369 = vmatpush.xpose.msra.mxu0 0.0
    %370 = vmatpush.xpose.msra.mxu0 0.0
    %371 = vmatpush.xpose.msra.mxu0 0.0
    %372 = vmatpush.xpose.msra.mxu0 0.0
    %373 = vmatpush.xpose.msra.mxu0 0.0
    %374 = vmatpush.xpose.msra.mxu0 0.0
    %375 = vmatpush.xpose.msra.mxu0 0.0
    %376 = vmatpush.xpose.msra.mxu0 0.0
    %377 = vmatpush.xpose.msra.mxu0 0.0
    %378 = vmatpush.xpose.msra.mxu0 %v281
    %379 = vmatmul.f32.gmra.mxu0 %v129
    %v380 = vpop.f32.mrf.mxu0
    %v381 = vadd.f32 0.0, %v380
    %382 = vdwg.mxu0
    %v384 = vsel %vm32, %v28, 0
    %386 = vmatpush.xpose.msra.mxu0 0.0
    %387 = vmatpush.xpose.msra.mxu0 0.0
    %388 = vmatpush.xpose.msra.mxu0 0.0
    %389 = vmatpush.xpose.msra.mxu0 0.0
    %390 = vmatpush.xpose.msra.mxu0 0.0
    %391 = vmatpush.xpose.msra.mxu0 0.0
    %392 = vmatpush.xpose.msra.mxu0 0.0
    %393 = vmatpush.xpose.msra.mxu0 0.0
    %394 = vmatpush.xpose.msra.mxu0 0.0
    %395 = vmatpush.xpose.msra.mxu0 0.0
    %396 = vmatpush.xpose.msra.mxu0 0.0
    %397 = vmatpush.xpose.msra.mxu0 0.0
    %398 = vmatpush.xpose.msra.mxu0 0.0
    %399 = vmatpush.xpose.msra.mxu0 0.0
    %400 = vmatpush.xpose.msra.mxu0 0.0
    %401 = vmatpush.xpose.msra.mxu0 %v384
    %402 = vmatmul.f32.gmra.mxu0 %v34
    %v403 = vpop.f32.mrf.mxu0
    %v404 = vadd.f32 0.0, %v403
    %405 = vdwg.mxu0
    %v407 = vsel %vm32, %v29, 0
    %409 = vmatpush.xpose.msra.mxu0 0.0
    %410 = vmatpush.xpose.msra.mxu0 0.0
    %411 = vmatpush.xpose.msra.mxu0 0.0
    %412 = vmatpush.xpose.msra.mxu0 0.0
    %413 = vmatpush.xpose.msra.mxu0 0.0
    %414 = vmatpush.xpose.msra.mxu0 0.0
    %415 = vmatpush.xpose.msra.mxu0 0.0
    %416 = vmatpush.xpose.msra.mxu0 0.0
    %417 = vmatpush.xpose.msra.mxu0 0.0
    %418 = vmatpush.xpose.msra.mxu0 0.0
    %419 = vmatpush.xpose.msra.mxu0 0.0
    %420 = vmatpush.xpose.msra.mxu0 0.0
    %421 = vmatpush.xpose.msra.mxu0 0.0
    %422 = vmatpush.xpose.msra.mxu0 0.0
    %423 = vmatpush.xpose.msra.mxu0 0.0
    %424 = vmatpush.xpose.msra.mxu0 %v407
    %425 = vmatmul.f32.gmra.mxu0 %v34
    %v426 = vpop.f32.mrf.mxu0
    %v427 = vadd.f32 0.0, %v426
    %428 = vdwg.mxu0
    %v430 = vsel %vm32, %v30, 0
    %432 = vmatpush.xpose.msra.mxu0 0.0
    %433 = vmatpush.xpose.msra.mxu0 0.0
    %434 = vmatpush.xpose.msra.mxu0 0.0
    %435 = vmatpush.xpose.msra.mxu0 0.0
    %436 = vmatpush.xpose.msra.mxu0 0.0
    %437 = vmatpush.xpose.msra.mxu0 0.0
    %438 = vmatpush.xpose.msra.mxu0 0.0
    %439 = vmatpush.xpose.msra.mxu0 0.0
    %440 = vmatpush.xpose.msra.mxu0 0.0
    %441 = vmatpush.xpose.msra.mxu0 0.0
    %442 = vmatpush.xpose.msra.mxu0 0.0
    %443 = vmatpush.xpose.msra.mxu0 0.0
    %444 = vmatpush.xpose.msra.mxu0 0.0
    %445 = vmatpush.xpose.msra.mxu0 0.0
    %446 = vmatpush.xpose.msra.mxu0 0.0
    %447 = vmatpush.xpose.msra.mxu0 %v430
    %448 = vmatmul.f32.gmra.mxu0 %v34
    %v449 = vpop.f32.mrf.mxu0
    %v450 = vadd.f32 0.0, %v449
    %451 = vdwg.mxu0
    %v453 = vsel %vm32, %v31, 0
    %455 = vmatpush.xpose.msra.mxu0 0.0
    %456 = vmatpush.xpose.msra.mxu0 0.0
    %457 = vmatpush.xpose.msra.mxu0 0.0
    %458 = vmatpush.xpose.msra.mxu0 0.0
    %459 = vmatpush.xpose.msra.mxu0 0.0
    %460 = vmatpush.xpose.msra.mxu0 0.0
    %461 = vmatpush.xpose.msra.mxu0 0.0
    %462 = vmatpush.xpose.msra.mxu0 0.0
    %463 = vmatpush.xpose.msra.mxu0 0.0
    %464 = vmatpush.xpose.msra.mxu0 0.0
    %465 = vmatpush.xpose.msra.mxu0 0.0
    %466 = vmatpush.xpose.msra.mxu0 0.0
    %467 = vmatpush.xpose.msra.mxu0 0.0
    %468 = vmatpush.xpose.msra.mxu0 0.0
    %469 = vmatpush.xpose.msra.mxu0 0.0
    %470 = vmatpush.xpose.msra.mxu0 %v453
    %471 = vmatmul.f32.gmra.mxu0 %v34
    %v472 = vpop.f32.mrf.mxu0
    %v473 = vadd.f32 0.0, %v472
    %474 = vdwg.mxu0
    %475 = vmatpush.xpose.msra.mxu0 0.0
    %476 = vmatpush.xpose.msra.mxu0 0.0
    %477 = vmatpush.xpose.msra.mxu0 0.0
    %478 = vmatpush.xpose.msra.mxu0 0.0
    %479 = vmatpush.xpose.msra.mxu0 0.0
    %480 = vmatpush.xpose.msra.mxu0 0.0
    %481 = vmatpush.xpose.msra.mxu0 0.0
    %482 = vmatpush.xpose.msra.mxu0 0.0
    %483 = vmatpush.xpose.msra.mxu0 0.0
    %484 = vmatpush.xpose.msra.mxu0 0.0
    %485 = vmatpush.xpose.msra.mxu0 0.0
    %486 = vmatpush.xpose.msra.mxu0 0.0
    %487 = vmatpush.xpose.msra.mxu0 0.0
    %488 = vmatpush.xpose.msra.mxu0 0.0
    %489 = vmatpush.xpose.msra.mxu0 0.0
    %490 = vmatpush.xpose.msra.mxu0 %v384
    %491 = vmatmul.f32.gmra.mxu0 %v129
    %v492 = vpop.f32.mrf.mxu0
    %v493 = vadd.f32 0.0, %v492
    %494 = vdwg.mxu0
    %495 = vmatpush.xpose.msra.mxu0 0.0
    %496 = vmatpush.xpose.msra.mxu0 0.0
    %497 = vmatpush.xpose.msra.mxu0 0.0
    %498 = vmatpush.xpose.msra.mxu0 0.0
    %499 = vmatpush.xpose.msra.mxu0 0.0
    %500 = vmatpush.xpose.msra.mxu0 0.0
    %501 = vmatpush.xpose.msra.mxu0 0.0
    %502 = vmatpush.xpose.msra.mxu0 0.0
    %503 = vmatpush.xpose.msra.mxu0 0.0
    %504 = vmatpush.xpose.msra.mxu0 0.0
    %505 = vmatpush.xpose.msra.mxu0 0.0
    %506 = vmatpush.xpose.msra.mxu0 0.0
    %507 = vmatpush.xpose.msra.mxu0 0.0
    %508 = vmatpush.xpose.msra.mxu0 0.0
    %509 = vmatpush.xpose.msra.mxu0 0.0
    %510 = vmatpush.xpose.msra.mxu0 %v407
    %511 = vmatmul.f32.gmra.mxu0 %v129
    %v512 = vpop.f32.mrf.mxu0
    %v513 = vadd.f32 0.0, %v512
    %514 = vdwg.mxu0
    %515 = vmatpush.xpose.msra.mxu0 0.0
    %516 = vmatpush.xpose.msra.mxu0 0.0
    %517 = vmatpush.xpose.msra.mxu0 0.0
    %518 = vmatpush.xpose.msra.mxu0 0.0
    %519 = vmatpush.xpose.msra.mxu0 0.0
    %520 = vmatpush.xpose.msra.mxu0 0.0
    %521 = vmatpush.xpose.msra.mxu0 0.0
    %522 = vmatpush.xpose.msra.mxu0 0.0
    %523 = vmatpush.xpose.msra.mxu0 0.0
    %524 = vmatpush.xpose.msra.mxu0 0.0
    %525 = vmatpush.xpose.msra.mxu0 0.0
    %526 = vmatpush.xpose.msra.mxu0 0.0
    %527 = vmatpush.xpose.msra.mxu0 0.0
    %528 = vmatpush.xpose.msra.mxu0 0.0
    %529 = vmatpush.xpose.msra.mxu0 0.0
    %530 = vmatpush.xpose.msra.mxu0 %v430
    %531 = vmatmul.f32.gmra.mxu0 %v129
    %v532 = vpop.f32.mrf.mxu0
    %v533 = vadd.f32 0.0, %v532
    %534 = vdwg.mxu0
    %535 = vmatpush.xpose.msra.mxu0 0.0
    %536 = vmatpush.xpose.msra.mxu0 0.0
    %537 = vmatpush.xpose.msra.mxu0 0.0
    %538 = vmatpush.xpose.msra.mxu0 0.0
    %539 = vmatpush.xpose.msra.mxu0 0.0
    %540 = vmatpush.xpose.msra.mxu0 0.0
    %541 = vmatpush.xpose.msra.mxu0 0.0
    %542 = vmatpush.xpose.msra.mxu0 0.0
    %543 = vmatpush.xpose.msra.mxu0 0.0
    %544 = vmatpush.xpose.msra.mxu0 0.0
    %545 = vmatpush.xpose.msra.mxu0 0.0
    %546 = vmatpush.xpose.msra.mxu0 0.0
    %547 = vmatpush.xpose.msra.mxu0 0.0
    %548 = vmatpush.xpose.msra.mxu0 0.0
    %549 = vmatpush.xpose.msra.mxu0 0.0
    %550 = vmatpush.xpose.msra.mxu0 %v453
    %551 = vmatmul.f32.gmra.mxu0 %v129
    %v552 = vpop.f32.mrf.mxu0
    %v553 = vadd.f32 0.0, %v552
    %554 = vdwg.mxu0
    %vm555 = vcmask 64512
    %v557 = vsel %vm555, %v57, 0
    %v560 = vsel %vm555, %v232, 0
    %562 = vmatpush.xpose.msra.mxu0 0.0
    %563 = vmatpush.xpose.msra.mxu0 0.0
    %564 = vmatpush.xpose.msra.mxu0 0.0
    %565 = vmatpush.xpose.msra.mxu0 0.0
    %566 = vmatpush.xpose.msra.mxu0 0.0
    %567 = vmatpush.xpose.msra.mxu0 0.0
    %568 = vmatpush.xpose.msra.mxu0 0.0
    %569 = vmatpush.xpose.msra.mxu0 0.0
    %570 = vmatpush.xpose.msra.mxu0 0.0
    %571 = vmatpush.xpose.msra.mxu0 0.0
    %572 = vmatpush.xpose.msra.mxu0 0.0
    %573 = vmatpush.xpose.msra.mxu0 0.0
    %574 = vmatpush.xpose.msra.mxu0 0.0
    %575 = vmatpush.xpose.msra.mxu0 0.0
    %576 = vmatpush.xpose.msra.mxu0 0.0
    %577 = vmatpush.xpose.msra.mxu0 %v560
    %578 = vmatmul.f32.gmra.mxu0 %v557
    %v579 = vpop.f32.mrf.mxu0
    %v580 = vadd.f32 0.0, %v579
    %581 = vdwg.mxu0
    %v583 = vsel %vm555, %v80, 0
    %v586 = vsel %vm555, %v255, 0
    %588 = vmatpush.xpose.msra.mxu0 0.0
    %589 = vmatpush.xpose.msra.mxu0 0.0
    %590 = vmatpush.xpose.msra.mxu0 0.0
    %591 = vmatpush.xpose.msra.mxu0 0.0
    %592 = vmatpush.xpose.msra.mxu0 0.0
    %593 = vmatpush.xpose.msra.mxu0 0.0
    %594 = vmatpush.xpose.msra.mxu0 0.0
    %595 = vmatpush.xpose.msra.mxu0 0.0
    %596 = vmatpush.xpose.msra.mxu0 0.0
    %597 = vmatpush.xpose.msra.mxu0 0.0
    %598 = vmatpush.xpose.msra.mxu0 0.0
    %599 = vmatpush.xpose.msra.mxu0 0.0
    %600 = vmatpush.xpose.msra.mxu0 0.0
    %601 = vmatpush.xpose.msra.mxu0 0.0
    %602 = vmatpush.xpose.msra.mxu0 0.0
    %603 = vmatpush.xpose.msra.mxu0 %v586
    %604 = vmatmul.f32.gmra.mxu0 %v583
    %v605 = vpop.f32.mrf.mxu0
    %v606 = vadd.f32 0.0, %v605
    %607 = vdwg.mxu0
    %v609 = vsel %vm555, %v103, 0
    %v612 = vsel %vm555, %v278, 0
    %614 = vmatpush.xpose.msra.mxu0 0.0
    %615 = vmatpush.xpose.msra.mxu0 0.0
    %616 = vmatpush.xpose.msra.mxu0 0.0
    %617 = vmatpush.xpose.msra.mxu0 0.0
    %618 = vmatpush.xpose.msra.mxu0 0.0
    %619 = vmatpush.xpose.msra.mxu0 0.0
    %620 = vmatpush.xpose.msra.mxu0 0.0
    %621 = vmatpush.xpose.msra.mxu0 0.0
    %622 = vmatpush.xpose.msra.mxu0 0.0
    %623 = vmatpush.xpose.msra.mxu0 0.0
    %624 = vmatpush.xpose.msra.mxu0 0.0
    %625 = vmatpush.xpose.msra.mxu0 0.0
    %626 = vmatpush.xpose.msra.mxu0 0.0
    %627 = vmatpush.xpose.msra.mxu0 0.0
    %628 = vmatpush.xpose.msra.mxu0 0.0
    %629 = vmatpush.xpose.msra.mxu0 %v612
    %630 = vmatmul.f32.gmra.mxu0 %v609
    %v631 = vpop.f32.mrf.mxu0
    %v632 = vadd.f32 0.0, %v631
    %633 = vdwg.mxu0
    %v635 = vsel %vm555, %v126, 0
    %v638 = vsel %vm555, %v301, 0
    %640 = vmatpush.xpose.msra.mxu0 0.0
    %641 = vmatpush.xpose.msra.mxu0 0.0
    %642 = vmatpush.xpose.msra.mxu0 0.0
    %643 = vmatpush.xpose.msra.mxu0 0.0
    %644 = vmatpush.xpose.msra.mxu0 0.0
    %645 = vmatpush.xpose.msra.mxu0 0.0
    %646 = vmatpush.xpose.msra.mxu0 0.0
    %647 = vmatpush.xpose.msra.mxu0 0.0
    %648 = vmatpush.xpose.msra.mxu0 0.0
    %649 = vmatpush.xpose.msra.mxu0 0.0
    %650 = vmatpush.xpose.msra.mxu0 0.0
    %651 = vmatpush.xpose.msra.mxu0 0.0
    %652 = vmatpush.xpose.msra.mxu0 0.0
    %653 = vmatpush.xpose.msra.mxu0 0.0
    %654 = vmatpush.xpose.msra.mxu0 0.0
    %655 = vmatpush.xpose.msra.mxu0 %v638
    %656 = vmatmul.f32.gmra.mxu0 %v635
    %v657 = vpop.f32.mrf.mxu0
    %v658 = vadd.f32 0.0, %v657
    %659 = vdwg.mxu0
    %v661 = vsel %vm555, %v149, 0
    %v664 = vsel %vm555, %v321, 0
    %666 = vmatpush.xpose.msra.mxu0 0.0
    %667 = vmatpush.xpose.msra.mxu0 0.0
    %668 = vmatpush.xpose.msra.mxu0 0.0
    %669 = vmatpush.xpose.msra.mxu0 0.0
    %670 = vmatpush.xpose.msra.mxu0 0.0
    %671 = vmatpush.xpose.msra.mxu0 0.0
    %672 = vmatpush.xpose.msra.mxu0 0.0
    %673 = vmatpush.xpose.msra.mxu0 0.0
    %674 = vmatpush.xpose.msra.mxu0 0.0
    %675 = vmatpush.xpose.msra.mxu0 0.0
    %676 = vmatpush.xpose.msra.mxu0 0.0
    %677 = vmatpush.xpose.msra.mxu0 0.0
    %678 = vmatpush.xpose.msra.mxu0 0.0
    %679 = vmatpush.xpose.msra.mxu0 0.0
    %680 = vmatpush.xpose.msra.mxu0 0.0
    %681 = vmatpush.xpose.msra.mxu0 %v664
    %682 = vmatmul.f32.gmra.mxu0 %v661
    %v683 = vpop.f32.mrf.mxu0
    %v684 = vadd.f32 0.0, %v683
    %685 = vdwg.mxu0
    %v687 = vsel %vm555, %v169, 0
    %v690 = vsel %vm555, %v341, 0
    %692 = vmatpush.xpose.msra.mxu0 0.0
    %693 = vmatpush.xpose.msra.mxu0 0.0
    %694 = vmatpush.xpose.msra.mxu0 0.0
    %695 = vmatpush.xpose.msra.mxu0 0.0
    %696 = vmatpush.xpose.msra.mxu0 0.0
    %697 = vmatpush.xpose.msra.mxu0 0.0
    %698 = vmatpush.xpose.msra.mxu0 0.0
    %699 = vmatpush.xpose.msra.mxu0 0.0
    %700 = vmatpush.xpose.msra.mxu0 0.0
    %701 = vmatpush.xpose.msra.mxu0 0.0
    %702 = vmatpush.xpose.msra.mxu0 0.0
    %703 = vmatpush.xpose.msra.mxu0 0.0
    %704 = vmatpush.xpose.msra.mxu0 0.0
    %705 = vmatpush.xpose.msra.mxu0 0.0
    %706 = vmatpush.xpose.msra.mxu0 0.0
    %707 = vmatpush.xpose.msra.mxu0 %v690
    %708 = vmatmul.f32.gmra.mxu0 %v687
    %v709 = vpop.f32.mrf.mxu0
    %v710 = vadd.f32 0.0, %v709
    %711 = vdwg.mxu0
    %v713 = vsel %vm555, %v189, 0
    %v716 = vsel %vm555, %v361, 0
    %718 = vmatpush.xpose.msra.mxu0 0.0
    %719 = vmatpush.xpose.msra.mxu0 0.0
    %720 = vmatpush.xpose.msra.mxu0 0.0
    %721 = vmatpush.xpose.msra.mxu0 0.0
    %722 = vmatpush.xpose.msra.mxu0 0.0
    %723 = vmatpush.xpose.msra.mxu0 0.0
    %724 = vmatpush.xpose.msra.mxu0 0.0
    %725 = vmatpush.xpose.msra.mxu0 0.0
    %726 = vmatpush.xpose.msra.mxu0 0.0
    %727 = vmatpush.xpose.msra.mxu0 0.0
    %728 = vmatpush.xpose.msra.mxu0 0.0
    %729 = vmatpush.xpose.msra.mxu0 0.0
    %730 = vmatpush.xpose.msra.mxu0 0.0
    %731 = vmatpush.xpose.msra.mxu0 0.0
    %732 = vmatpush.xpose.msra.mxu0 0.0
    %733 = vmatpush.xpose.msra.mxu0 %v716
    %734 = vmatmul.f32.gmra.mxu0 %v713
    %v735 = vpop.f32.mrf.mxu0
    %v736 = vadd.f32 0.0, %v735
    %737 = vdwg.mxu0
    %v739 = vsel %vm555, %v209, 0
    %v742 = vsel %vm555, %v381, 0
    %744 = vmatpush.xpose.msra.mxu0 0.0
    %745 = vmatpush.xpose.msra.mxu0 0.0
    %746 = vmatpush.xpose.msra.mxu0 0.0
    %747 = vmatpush.xpose.msra.mxu0 0.0
    %748 = vmatpush.xpose.msra.mxu0 0.0
    %749 = vmatpush.xpose.msra.mxu0 0.0
    %750 = vmatpush.xpose.msra.mxu0 0.0
    %751 = vmatpush.xpose.msra.mxu0 0.0
    %752 = vmatpush.xpose.msra.mxu0 0.0
    %753 = vmatpush.xpose.msra.mxu0 0.0
    %754 = vmatpush.xpose.msra.mxu0 0.0
    %755 = vmatpush.xpose.msra.mxu0 0.0
    %756 = vmatpush.xpose.msra.mxu0 0.0
    %757 = vmatpush.xpose.msra.mxu0 0.0
    %758 = vmatpush.xpose.msra.mxu0 0.0
    %759 = vmatpush.xpose.msra.mxu0 %v742
    %760 = vmatmul.f32.gmra.mxu0 %v739
    %v761 = vpop.f32.mrf.mxu0
    %v762 = vadd.f32 0.0, %v761
    %763 = vdwg.mxu0
    %v764 = vsel %vm555, %v580, -inf
    %765 = vmax.xlane.f32.xlu0 %v764
    %v766 = vpop.xlane.xlu0 %765
    %v767 = vsel %vm555, %v606, -inf
    %768 = vmax.xlane.f32.xlu0 %v767
    %v769 = vpop.xlane.xlu0 %768
    %v770 = vsel %vm555, %v632, -inf
    %771 = vmax.xlane.f32.xlu0 %v770
    %v772 = vpop.xlane.xlu0 %771
    %v773 = vsel %vm555, %v658, -inf
    %774 = vmax.xlane.f32.xlu0 %v773
    %v775 = vpop.xlane.xlu0 %774
    %v776 = vsel %vm555, %v684, -inf
    %777 = vmax.xlane.f32.xlu0 %v776
    %v778 = vpop.xlane.xlu0 %777
    %v779 = vsel %vm555, %v710, -inf
    %780 = vmax.xlane.f32.xlu0 %v779
    %v781 = vpop.xlane.xlu0 %780
    %v782 = vsel %vm555, %v736, -inf
    %783 = vmax.xlane.f32.xlu0 %v782
    %v784 = vpop.xlane.xlu0 %783
    %v785 = vsel %vm555, %v762, -inf
    %786 = vmax.xlane.f32.xlu0 %v785
    %v787 = vpop.xlane.xlu0 %786
    %v788 = vsub.f32 %v580, %v766
    %v789 = vsub.f32 %v606, %v769
    %v790 = vsub.f32 %v632, %v772
    %v791 = vsub.f32 %v658, %v775
    %v792 = vsub.f32 %v684, %v778
    %v793 = vsub.f32 %v710, %v781
    %v794 = vsub.f32 %v736, %v784
    %v795 = vsub.f32 %v762, %v787
    %v796 = vmul.f32 %v788, 1.442695
    %v797 = vpow.pop %v796
    %v798 = vmul.f32 %v789, 1.442695
    %v799 = vpow.pop %v798
    %v800 = vmul.f32 %v790, 1.442695
    %v801 = vpow.pop %v800
    %v802 = vmul.f32 %v791, 1.442695
    %v803 = vpow.pop %v802
    %v804 = vmul.f32 %v792, 1.442695
    %v805 = vpow.pop %v804
    %v806 = vmul.f32 %v793, 1.442695
    %v807 = vpow.pop %v806
    %v808 = vmul.f32 %v794, 1.442695
    %v809 = vpow.pop %v808
    %v810 = vmul.f32 %v795, 1.442695
    %v811 = vpow.pop %v810
    %v812 = vsel %vm555, %v797, 0.0
    %813 = vadd.xlane.f32.xlu0 %v812
    %v814 = vpop.xlane.xlu0 %813
    %v815 = vsel %vm555, %v799, 0.0
    %816 = vadd.xlane.f32.xlu0 %v815
    %v817 = vpop.xlane.xlu0 %816
    %v818 = vsel %vm555, %v801, 0.0
    %819 = vadd.xlane.f32.xlu0 %v818
    %v820 = vpop.xlane.xlu0 %819
    %v821 = vsel %vm555, %v803, 0.0
    %822 = vadd.xlane.f32.xlu0 %v821
    %v823 = vpop.xlane.xlu0 %822
    %v824 = vsel %vm555, %v805, 0.0
    %825 = vadd.xlane.f32.xlu0 %v824
    %v826 = vpop.xlane.xlu0 %825
    %v827 = vsel %vm555, %v807, 0.0
    %828 = vadd.xlane.f32.xlu0 %v827
    %v829 = vpop.xlane.xlu0 %828
    %v830 = vsel %vm555, %v809, 0.0
    %831 = vadd.xlane.f32.xlu0 %v830
    %v832 = vpop.xlane.xlu0 %831
    %v833 = vsel %vm555, %v811, 0.0
    %834 = vadd.xlane.f32.xlu0 %v833
    %v835 = vpop.xlane.xlu0 %834
    %v836 = vrcp.pop %v814
    %v837 = vmul.f32 %v814, %v836
    %v838 = vsub.f32 1.0, %v837
    %v839 = vmul.f32 %v836, %v838
    %v840 = vadd.f32 %v836, %v839
    %vm841 = vweird.f32 %v814
    %vm842 = vweird.f32 %v836
    %vm843 = vmor %vm841, %vm842
    %v844 = vsel %vm843, %v836, %v840
    %v845 = vand.u32 2147483647, %v814
    %vm846 = vcmp.eq.f32.partialorder %v845, 8.507059e+37
    %v847 = vand.u32 %v814, 2147483648
    %v848 = vor.u32 1.1754944e-38, %v847
    %v849 = vsel %vm846, %v848, %v844
    %v850 = vrcp.pop %v817
    %v851 = vmul.f32 %v817, %v850
    %v852 = vsub.f32 1.0, %v851
    %v853 = vmul.f32 %v850, %v852
    %v854 = vadd.f32 %v850, %v853
    %vm855 = vweird.f32 %v817
    %vm856 = vweird.f32 %v850
    %vm857 = vmor %vm855, %vm856
    %v858 = vsel %vm857, %v850, %v854
    %v859 = vand.u32 2147483647, %v817
    %vm860 = vcmp.eq.f32.partialorder %v859, 8.507059e+37
    %v861 = vand.u32 %v817, 2147483648
    %v862 = vor.u32 1.1754944e-38, %v861
    %v863 = vsel %vm860, %v862, %v858
    %v864 = vrcp.pop %v820
    %v865 = vmul.f32 %v820, %v864
    %v866 = vsub.f32 1.0, %v865
    %v867 = vmul.f32 %v864, %v866
    %v868 = vadd.f32 %v864, %v867
    %vm869 = vweird.f32 %v820
    %vm870 = vweird.f32 %v864
    %vm871 = vmor %vm869, %vm870
    %v872 = vsel %vm871, %v864, %v868
    %v873 = vand.u32 2147483647, %v820
    %vm874 = vcmp.eq.f32.partialorder %v873, 8.507059e+37
    %v875 = vand.u32 %v820, 2147483648
    %v876 = vor.u32 1.1754944e-38, %v875
    %v877 = vsel %vm874, %v876, %v872
    %v878 = vrcp.pop %v823
    %v879 = vmul.f32 %v823, %v878
    %v880 = vsub.f32 1.0, %v879
    %v881 = vmul.f32 %v878, %v880
    %v882 = vadd.f32 %v878, %v881
    %vm883 = vweird.f32 %v823
    %vm884 = vweird.f32 %v878
    %vm885 = vmor %vm883, %vm884
    %v886 = vsel %vm885, %v878, %v882
    %v887 = vand.u32 2147483647, %v823
    %vm888 = vcmp.eq.f32.partialorder %v887, 8.507059e+37
    %v889 = vand.u32 %v823, 2147483648
    %v890 = vor.u32 1.1754944e-38, %v889
    %v891 = vsel %vm888, %v890, %v886
    %v892 = vrcp.pop %v826
    %v893 = vmul.f32 %v826, %v892
    %v894 = vsub.f32 1.0, %v893
    %v895 = vmul.f32 %v892, %v894
    %v896 = vadd.f32 %v892, %v895
    %vm897 = vweird.f32 %v826
    %vm898 = vweird.f32 %v892
    %vm899 = vmor %vm897, %vm898
    %v900 = vsel %vm899, %v892, %v896
    %v901 = vand.u32 2147483647, %v826
    %vm902 = vcmp.eq.f32.partialorder %v901, 8.507059e+37
    %v903 = vand.u32 %v826, 2147483648
    %v904 = vor.u32 1.1754944e-38, %v903
    %v905 = vsel %vm902, %v904, %v900
    %v906 = vrcp.pop %v829
    %v907 = vmul.f32 %v829, %v906
    %v908 = vsub.f32 1.0, %v907
    %v909 = vmul.f32 %v906, %v908
    %v910 = vadd.f32 %v906, %v909
    %vm911 = vweird.f32 %v829
    %vm912 = vweird.f32 %v906
    %vm913 = vmor %vm911, %vm912
    %v914 = vsel %vm913, %v906, %v910
    %v915 = vand.u32 2147483647, %v829
    %vm916 = vcmp.eq.f32.partialorder %v915, 8.507059e+37
    %v917 = vand.u32 %v829, 2147483648
    %v918 = vor.u32 1.1754944e-38, %v917
    %v919 = vsel %vm916, %v918, %v914
    %v920 = vrcp.pop %v832
    %v921 = vmul.f32 %v832, %v920
    %v922 = vsub.f32 1.0, %v921
    %v923 = vmul.f32 %v920, %v922
    %v924 = vadd.f32 %v920, %v923
    %vm925 = vweird.f32 %v832
    %vm926 = vweird.f32 %v920
    %vm927 = vmor %vm925, %vm926
    %v928 = vsel %vm927, %v920, %v924
    %v929 = vand.u32 2147483647, %v832
    %vm930 = vcmp.eq.f32.partialorder %v929, 8.507059e+37
    %v931 = vand.u32 %v832, 2147483648
    %v932 = vor.u32 1.1754944e-38, %v931
    %v933 = vsel %vm930, %v932, %v928
    %v934 = vrcp.pop %v835
    %v935 = vmul.f32 %v835, %v934
    %v936 = vsub.f32 1.0, %v935
    %v937 = vmul.f32 %v934, %v936
    %v938 = vadd.f32 %v934, %v937
    %vm939 = vweird.f32 %v835
    %vm940 = vweird.f32 %v934
    %vm941 = vmor %vm939, %vm940
    %v942 = vsel %vm941, %v934, %v938
    %v943 = vand.u32 2147483647, %v835
    %vm944 = vcmp.eq.f32.partialorder %v943, 8.507059e+37
    %v945 = vand.u32 %v835, 2147483648
    %v946 = vor.u32 1.1754944e-38, %v945
    %v947 = vsel %vm944, %v946, %v942
    %v948 = vmul.f32 %v797, %v849
    %v949 = vmul.f32 %v799, %v863
    %v950 = vmul.f32 %v801, %v877
    %v951 = vmul.f32 %v803, %v891
    %v952 = vmul.f32 %v805, %v905
    %v953 = vmul.f32 %v807, %v919
    %v954 = vmul.f32 %v809, %v933
    %v955 = vmul.f32 %v811, %v947
    %v957 = vsel %vm555, %v948, 0
    %959 = vmatpush.msra.mxu0 0.0
    %960 = vmatpush.msra.mxu0 0.0
    %961 = vmatpush.msra.mxu0 0.0
    %962 = vmatpush.msra.mxu0 0.0
    %963 = vmatpush.msra.mxu0 0.0
    %964 = vmatpush.msra.mxu0 0.0
    %965 = vmatpush.msra.mxu0 0.0
    %966 = vmatpush.msra.mxu0 0.0
    %967 = vmatpush.msra.mxu0 0.0
    %968 = vmatpush.msra.mxu0 0.0
    %969 = vmatpush.msra.mxu0 0.0
    %970 = vmatpush.msra.mxu0 0.0
    %971 = vmatpush.msra.mxu0 0.0
    %972 = vmatpush.msra.mxu0 0.0
    %973 = vmatpush.msra.mxu0 0.0
    %974 = vmatpush.msra.mxu0 %v404
    %975 = vmatmul.f32.gmra.mxu0 %v957
    %v976 = vpop.f32.mrf.mxu0
    %v977 = vadd.f32 0.0, %v976
    %978 = vdwg.mxu0
    %v980 = vsel %vm555, %v949, 0
    %982 = vmatpush.msra.mxu0 0.0
    %983 = vmatpush.msra.mxu0 0.0
    %984 = vmatpush.msra.mxu0 0.0
    %985 = vmatpush.msra.mxu0 0.0
    %986 = vmatpush.msra.mxu0 0.0
    %987 = vmatpush.msra.mxu0 0.0
    %988 = vmatpush.msra.mxu0 0.0
    %989 = vmatpush.msra.mxu0 0.0
    %990 = vmatpush.msra.mxu0 0.0
    %991 = vmatpush.msra.mxu0 0.0
    %992 = vmatpush.msra.mxu0 0.0
    %993 = vmatpush.msra.mxu0 0.0
    %994 = vmatpush.msra.mxu0 0.0
    %995 = vmatpush.msra.mxu0 0.0
    %996 = vmatpush.msra.mxu0 0.0
    %997 = vmatpush.msra.mxu0 %v427
    %998 = vmatmul.f32.gmra.mxu0 %v980
    %v999 = vpop.f32.mrf.mxu0
    %v1000 = vadd.f32 0.0, %v999
    %1001 = vdwg.mxu0
    %v1003 = vsel %vm555, %v950, 0
    %1005 = vmatpush.msra.mxu0 0.0
    %1006 = vmatpush.msra.mxu0 0.0
    %1007 = vmatpush.msra.mxu0 0.0
    %1008 = vmatpush.msra.mxu0 0.0
    %1009 = vmatpush.msra.mxu0 0.0
    %1010 = vmatpush.msra.mxu0 0.0
    %1011 = vmatpush.msra.mxu0 0.0
    %1012 = vmatpush.msra.mxu0 0.0
    %1013 = vmatpush.msra.mxu0 0.0
    %1014 = vmatpush.msra.mxu0 0.0
    %1015 = vmatpush.msra.mxu0 0.0
    %1016 = vmatpush.msra.mxu0 0.0
    %1017 = vmatpush.msra.mxu0 0.0
    %1018 = vmatpush.msra.mxu0 0.0
    %1019 = vmatpush.msra.mxu0 0.0
    %1020 = vmatpush.msra.mxu0 %v450
    %1021 = vmatmul.f32.gmra.mxu0 %v1003
    %v1022 = vpop.f32.mrf.mxu0
    %v1023 = vadd.f32 0.0, %v1022
    %1024 = vdwg.mxu0
    %v1026 = vsel %vm555, %v951, 0
    %1028 = vmatpush.msra.mxu0 0.0
    %1029 = vmatpush.msra.mxu0 0.0
    %1030 = vmatpush.msra.mxu0 0.0
    %1031 = vmatpush.msra.mxu0 0.0
    %1032 = vmatpush.msra.mxu0 0.0
    %1033 = vmatpush.msra.mxu0 0.0
    %1034 = vmatpush.msra.mxu0 0.0
    %1035 = vmatpush.msra.mxu0 0.0
    %1036 = vmatpush.msra.mxu0 0.0
    %1037 = vmatpush.msra.mxu0 0.0
    %1038 = vmatpush.msra.mxu0 0.0
    %1039 = vmatpush.msra.mxu0 0.0
    %1040 = vmatpush.msra.mxu0 0.0
    %1041 = vmatpush.msra.mxu0 0.0
    %1042 = vmatpush.msra.mxu0 0.0
    %1043 = vmatpush.msra.mxu0 %v473
    %1044 = vmatmul.f32.gmra.mxu0 %v1026
    %v1045 = vpop.f32.mrf.mxu0
    %v1046 = vadd.f32 0.0, %v1045
    %1047 = vdwg.mxu0
    %v1049 = vsel %vm555, %v952, 0
    %1051 = vmatpush.msra.mxu0 0.0
    %1052 = vmatpush.msra.mxu0 0.0
    %1053 = vmatpush.msra.mxu0 0.0
    %1054 = vmatpush.msra.mxu0 0.0
    %1055 = vmatpush.msra.mxu0 0.0
    %1056 = vmatpush.msra.mxu0 0.0
    %1057 = vmatpush.msra.mxu0 0.0
    %1058 = vmatpush.msra.mxu0 0.0
    %1059 = vmatpush.msra.mxu0 0.0
    %1060 = vmatpush.msra.mxu0 0.0
    %1061 = vmatpush.msra.mxu0 0.0
    %1062 = vmatpush.msra.mxu0 0.0
    %1063 = vmatpush.msra.mxu0 0.0
    %1064 = vmatpush.msra.mxu0 0.0
    %1065 = vmatpush.msra.mxu0 0.0
    %1066 = vmatpush.msra.mxu0 %v493
    %1067 = vmatmul.f32.gmra.mxu0 %v1049
    %v1068 = vpop.f32.mrf.mxu0
    %v1069 = vadd.f32 0.0, %v1068
    %1070 = vdwg.mxu0
    %v1072 = vsel %vm555, %v953, 0
    %1074 = vmatpush.msra.mxu0 0.0
    %1075 = vmatpush.msra.mxu0 0.0
    %1076 = vmatpush.msra.mxu0 0.0
    %1077 = vmatpush.msra.mxu0 0.0
    %1078 = vmatpush.msra.mxu0 0.0
    %1079 = vmatpush.msra.mxu0 0.0
    %1080 = vmatpush.msra.mxu0 0.0
    %1081 = vmatpush.msra.mxu0 0.0
    %1082 = vmatpush.msra.mxu0 0.0
    %1083 = vmatpush.msra.mxu0 0.0
    %1084 = vmatpush.msra.mxu0 0.0
    %1085 = vmatpush.msra.mxu0 0.0
    %1086 = vmatpush.msra.mxu0 0.0
    %1087 = vmatpush.msra.mxu0 0.0
    %1088 = vmatpush.msra.mxu0 0.0
    %1089 = vmatpush.msra.mxu0 %v513
    %1090 = vmatmul.f32.gmra.mxu0 %v1072
    %v1091 = vpop.f32.mrf.mxu0
    %v1092 = vadd.f32 0.0, %v1091
    %1093 = vdwg.mxu0
    %v1095 = vsel %vm555, %v954, 0
    %1097 = vmatpush.msra.mxu0 0.0
    %1098 = vmatpush.msra.mxu0 0.0
    %1099 = vmatpush.msra.mxu0 0.0
    %1100 = vmatpush.msra.mxu0 0.0
    %1101 = vmatpush.msra.mxu0 0.0
    %1102 = vmatpush.msra.mxu0 0.0
    %1103 = vmatpush.msra.mxu0 0.0
    %1104 = vmatpush.msra.mxu0 0.0
    %1105 = vmatpush.msra.mxu0 0.0
    %1106 = vmatpush.msra.mxu0 0.0
    %1107 = vmatpush.msra.mxu0 0.0
    %1108 = vmatpush.msra.mxu0 0.0
    %1109 = vmatpush.msra.mxu0 0.0
    %1110 = vmatpush.msra.mxu0 0.0
    %1111 = vmatpush.msra.mxu0 0.0
    %1112 = vmatpush.msra.mxu0 %v533
    %1113 = vmatmul.f32.gmra.mxu0 %v1095
    %v1114 = vpop.f32.mrf.mxu0
    %v1115 = vadd.f32 0.0, %v1114
    %1116 = vdwg.mxu0
    %v1118 = vsel %vm555, %v955, 0
    %1120 = vmatpush.msra.mxu0 0.0
    %1121 = vmatpush.msra.mxu0 0.0
    %1122 = vmatpush.msra.mxu0 0.0
    %1123 = vmatpush.msra.mxu0 0.0
    %1124 = vmatpush.msra.mxu0 0.0
    %1125 = vmatpush.msra.mxu0 0.0
    %1126 = vmatpush.msra.mxu0 0.0
    %1127 = vmatpush.msra.mxu0 0.0
    %1128 = vmatpush.msra.mxu0 0.0
    %1129 = vmatpush.msra.mxu0 0.0
    %1130 = vmatpush.msra.mxu0 0.0
    %1131 = vmatpush.msra.mxu0 0.0
    %1132 = vmatpush.msra.mxu0 0.0
    %1133 = vmatpush.msra.mxu0 0.0
    %1134 = vmatpush.msra.mxu0 0.0
    %1135 = vmatpush.msra.mxu0 %v553
    %1136 = vmatmul.f32.gmra.mxu0 %v1118
    %v1137 = vpop.f32.mrf.mxu0
    %v1138 = vadd.f32 0.0, %v1137
    %1139 = vdwg.mxu0
    %v1140 = vld [vmem:[%s2] sm:$0xff]
    %v1141 = vld [vmem:[%s2 + $0x8] sm:$0xff]
    %v1142 = vld [vmem:[%s2 + $0x10] sm:$0xff]
    %v1143 = vld [vmem:[%s2 + $0x18] sm:$0xff]
    %v1144 = vld [vmem:[%s2 + $0x20] sm:$0xff]
    %v1145 = vld [vmem:[%s2 + $0x28] sm:$0xff]
    %v1146 = vld [vmem:[%s2 + $0x30] sm:$0xff]
    %v1147 = vld [vmem:[%s2 + $0x38] sm:$0xff]
    %v1148 = vld [vmem:[%s2 + $0x40] sm:$0xff]
    %v1149 = vld [vmem:[%s2 + $0x48] sm:$0xff]
    %v1150 = vld [vmem:[%s2 + $0x50] sm:$0xff]
    %v1151 = vld [vmem:[%s2 + $0x58] sm:$0xff]
    %v1152 = vld [vmem:[%s2 + $0x60] sm:$0xff]
    %v1153 = vld [vmem:[%s2 + $0x68] sm:$0xff]
    %v1154 = vld [vmem:[%s2 + $0x70] sm:$0xff]
    %v1155 = vld [vmem:[%s2 + $0x78] sm:$0xff]
    %v1157 = vsel %vm555, %v977, 0
    %v1160 = vsel %vm555, %v1140, 0
    %v1163 = vsel %vm555, %v1141, 0
    %v1166 = vsel %vm555, %v1142, 0
    %v1169 = vsel %vm555, %v1143, 0
    %1171 = vmatpush.xpose.msra.mxu0 0.0
    %1172 = vmatpush.xpose.msra.mxu0 0.0
    %1173 = vmatpush.xpose.msra.mxu0 0.0
    %1174 = vmatpush.xpose.msra.mxu0 0.0
    %1175 = vmatpush.xpose.msra.mxu0 0.0
    %1176 = vmatpush.xpose.msra.mxu0 0.0
    %1177 = vmatpush.xpose.msra.mxu0 0.0
    %1178 = vmatpush.xpose.msra.mxu0 0.0
    %1179 = vmatpush.xpose.msra.mxu0 0.0
    %1180 = vmatpush.xpose.msra.mxu0 0.0
    %1181 = vmatpush.xpose.msra.mxu0 0.0
    %1182 = vmatpush.xpose.msra.mxu0 0.0
    %1183 = vmatpush.xpose.msra.mxu0 %v1169
    %1184 = vmatpush.xpose.msra.mxu0 %v1166
    %1185 = vmatpush.xpose.msra.mxu0 %v1163
    %1186 = vmatpush.xpose.msra.mxu0 %v1160
    %1187 = vmatmul.f32.gmra.mxu0 %v1157
    %v1188 = vpop.f32.mrf.mxu0
    %v1189 = vadd.f32 0.0, %v1188
    %1190 = vdwg.mxu0
    %v1192 = vsel %vm555, %v1000, 0
    %v1195 = vsel %vm555, %v1144, 0
    %v1198 = vsel %vm555, %v1145, 0
    %v1201 = vsel %vm555, %v1146, 0
    %v1204 = vsel %vm555, %v1147, 0
    %1206 = vmatpush.xpose.msra.mxu0 0.0
    %1207 = vmatpush.xpose.msra.mxu0 0.0
    %1208 = vmatpush.xpose.msra.mxu0 0.0
    %1209 = vmatpush.xpose.msra.mxu0 0.0
    %1210 = vmatpush.xpose.msra.mxu0 0.0
    %1211 = vmatpush.xpose.msra.mxu0 0.0
    %1212 = vmatpush.xpose.msra.mxu0 0.0
    %1213 = vmatpush.xpose.msra.mxu0 0.0
    %1214 = vmatpush.xpose.msra.mxu0 0.0
    %1215 = vmatpush.xpose.msra.mxu0 0.0
    %1216 = vmatpush.xpose.msra.mxu0 0.0
    %1217 = vmatpush.xpose.msra.mxu0 0.0
    %1218 = vmatpush.xpose.msra.mxu0 %v1204
    %1219 = vmatpush.xpose.msra.mxu0 %v1201
    %1220 = vmatpush.xpose.msra.mxu0 %v1198
    %1221 = vmatpush.xpose.msra.mxu0 %v1195
    %1222 = vmatmul.f32.gmra.mxu0 %v1192
    %v1223 = vpop.f32.mrf.mxu0
    %v1224 = vadd.f32 0.0, %v1223
    %1225 = vdwg.mxu0
    %v1227 = vsel %vm555, %v1023, 0
    %v1230 = vsel %vm555, %v1148, 0
    %v1233 = vsel %vm555, %v1149, 0
    %v1236 = vsel %vm555, %v1150, 0
    %v1239 = vsel %vm555, %v1151, 0
    %1241 = vmatpush.xpose.msra.mxu0 0.0
    %1242 = vmatpush.xpose.msra.mxu0 0.0
    %1243 = vmatpush.xpose.msra.mxu0 0.0
    %1244 = vmatpush.xpose.msra.mxu0 0.0
    %1245 = vmatpush.xpose.msra.mxu0 0.0
    %1246 = vmatpush.xpose.msra.mxu0 0.0
    %1247 = vmatpush.xpose.msra.mxu0 0.0
    %1248 = vmatpush.xpose.msra.mxu0 0.0
    %1249 = vmatpush.xpose.msra.mxu0 0.0
    %1250 = vmatpush.xpose.msra.mxu0 0.0
    %1251 = vmatpush.xpose.msra.mxu0 0.0
    %1252 = vmatpush.xpose.msra.mxu0 0.0
    %1253 = vmatpush.xpose.msra.mxu0 %v1239
    %1254 = vmatpush.xpose.msra.mxu0 %v1236
    %1255 = vmatpush.xpose.msra.mxu0 %v1233
    %1256 = vmatpush.xpose.msra.mxu0 %v1230
    %1257 = vmatmul.f32.gmra.mxu0 %v1227
    %v1258 = vpop.f32.mrf.mxu0
    %v1259 = vadd.f32 0.0, %v1258
    %1260 = vdwg.mxu0
    %v1262 = vsel %vm555, %v1046, 0
    %v1265 = vsel %vm555, %v1152, 0
    %v1268 = vsel %vm555, %v1153, 0
    %v1271 = vsel %vm555, %v1154, 0
    %v1274 = vsel %vm555, %v1155, 0
    %1276 = vmatpush.xpose.msra.mxu0 0.0
    %1277 = vmatpush.xpose.msra.mxu0 0.0
    %1278 = vmatpush.xpose.msra.mxu0 0.0
    %1279 = vmatpush.xpose.msra.mxu0 0.0
    %1280 = vmatpush.xpose.msra.mxu0 0.0
    %1281 = vmatpush.xpose.msra.mxu0 0.0
    %1282 = vmatpush.xpose.msra.mxu0 0.0
    %1283 = vmatpush.xpose.msra.mxu0 0.0
    %1284 = vmatpush.xpose.msra.mxu0 0.0
    %1285 = vmatpush.xpose.msra.mxu0 0.0
    %1286 = vmatpush.xpose.msra.mxu0 0.0
    %1287 = vmatpush.xpose.msra.mxu0 0.0
    %1288 = vmatpush.xpose.msra.mxu0 %v1274
    %1289 = vmatpush.xpose.msra.mxu0 %v1271
    %1290 = vmatpush.xpose.msra.mxu0 %v1268
    %1291 = vmatpush.xpose.msra.mxu0 %v1265
    %1292 = vmatmul.f32.gmra.mxu0 %v1262
    %v1293 = vpop.f32.mrf.mxu0
    %v1294 = vadd.f32 0.0, %v1293
    %1295 = vdwg.mxu0
    %v1297 = vsel %vm555, %v1069, 0
    %1299 = vmatpush.xpose.msra.mxu0 0.0
    %1300 = vmatpush.xpose.msra.mxu0 0.0
    %1301 = vmatpush.xpose.msra.mxu0 0.0
    %1302 = vmatpush.xpose.msra.mxu0 0.0
    %1303 = vmatpush.xpose.msra.mxu0 0.0
    %1304 = vmatpush.xpose.msra.mxu0 0.0
    %1305 = vmatpush.xpose.msra.mxu0 0.0
    %1306 = vmatpush.xpose.msra.mxu0 0.0
    %1307 = vmatpush.xpose.msra.mxu0 0.0
    %1308 = vmatpush.xpose.msra.mxu0 0.0
    %1309 = vmatpush.xpose.msra.mxu0 0.0
    %1310 = vmatpush.xpose.msra.mxu0 0.0
    %1311 = vmatpush.xpose.msra.mxu0 %v1169
    %1312 = vmatpush.xpose.msra.mxu0 %v1166
    %1313 = vmatpush.xpose.msra.mxu0 %v1163
    %1314 = vmatpush.xpose.msra.mxu0 %v1160
    %1315 = vmatmul.f32.gmra.mxu0 %v1297
    %v1316 = vpop.f32.mrf.mxu0
    %v1317 = vadd.f32 0.0, %v1316
    %1318 = vdwg.mxu0
    %v1320 = vsel %vm555, %v1092, 0
    %1322 = vmatpush.xpose.msra.mxu0 0.0
    %1323 = vmatpush.xpose.msra.mxu0 0.0
    %1324 = vmatpush.xpose.msra.mxu0 0.0
    %1325 = vmatpush.xpose.msra.mxu0 0.0
    %1326 = vmatpush.xpose.msra.mxu0 0.0
    %1327 = vmatpush.xpose.msra.mxu0 0.0
    %1328 = vmatpush.xpose.msra.mxu0 0.0
    %1329 = vmatpush.xpose.msra.mxu0 0.0
    %1330 = vmatpush.xpose.msra.mxu0 0.0
    %1331 = vmatpush.xpose.msra.mxu0 0.0
    %1332 = vmatpush.xpose.msra.mxu0 0.0
    %1333 = vmatpush.xpose.msra.mxu0 0.0
    %1334 = vmatpush.xpose.msra.mxu0 %v1204
    %1335 = vmatpush.xpose.msra.mxu0 %v1201
    %1336 = vmatpush.xpose.msra.mxu0 %v1198
    %1337 = vmatpush.xpose.msra.mxu0 %v1195
    %1338 = vmatmul.f32.gmra.mxu0 %v1320
    %v1339 = vpop.f32.mrf.mxu0
    %v1340 = vadd.f32 0.0, %v1339
    %1341 = vdwg.mxu0
    %v1343 = vsel %vm555, %v1115, 0
    %1345 = vmatpush.xpose.msra.mxu0 0.0
    %1346 = vmatpush.xpose.msra.mxu0 0.0
    %1347 = vmatpush.xpose.msra.mxu0 0.0
    %1348 = vmatpush.xpose.msra.mxu0 0.0
    %1349 = vmatpush.xpose.msra.mxu0 0.0
    %1350 = vmatpush.xpose.msra.mxu0 0.0
    %1351 = vmatpush.xpose.msra.mxu0 0.0
    %1352 = vmatpush.xpose.msra.mxu0 0.0
    %1353 = vmatpush.xpose.msra.mxu0 0.0
    %1354 = vmatpush.xpose.msra.mxu0 0.0
    %1355 = vmatpush.xpose.msra.mxu0 0.0
    %1356 = vmatpush.xpose.msra.mxu0 0.0
    %1357 = vmatpush.xpose.msra.mxu0 %v1239
    %1358 = vmatpush.xpose.msra.mxu0 %v1236
    %1359 = vmatpush.xpose.msra.mxu0 %v1233
    %1360 = vmatpush.xpose.msra.mxu0 %v1230
    %1361 = vmatmul.f32.gmra.mxu0 %v1343
    %v1362 = vpop.f32.mrf.mxu0
    %v1363 = vadd.f32 0.0, %v1362
    %1364 = vdwg.mxu0
    %v1366 = vsel %vm555, %v1138, 0
    %1368 = vmatpush.xpose.msra.mxu0 0.0
    %1369 = vmatpush.xpose.msra.mxu0 0.0
    %1370 = vmatpush.xpose.msra.mxu0 0.0
    %1371 = vmatpush.xpose.msra.mxu0 0.0
    %1372 = vmatpush.xpose.msra.mxu0 0.0
    %1373 = vmatpush.xpose.msra.mxu0 0.0
    %1374 = vmatpush.xpose.msra.mxu0 0.0
    %1375 = vmatpush.xpose.msra.mxu0 0.0
    %1376 = vmatpush.xpose.msra.mxu0 0.0
    %1377 = vmatpush.xpose.msra.mxu0 0.0
    %1378 = vmatpush.xpose.msra.mxu0 0.0
    %1379 = vmatpush.xpose.msra.mxu0 0.0
    %1380 = vmatpush.xpose.msra.mxu0 %v1274
    %1381 = vmatpush.xpose.msra.mxu0 %v1271
    %1382 = vmatpush.xpose.msra.mxu0 %v1268
    %1383 = vmatpush.xpose.msra.mxu0 %v1265
    %1384 = vmatmul.f32.gmra.mxu0 %v1366
    %v1385 = vpop.f32.mrf.mxu0
    %v1386 = vadd.f32 0.0, %v1385
    %1387 = vdwg.mxu0
    %v1388 = vadd.f32 %v1189, %v1224
    %v1389 = vadd.f32 %v1317, %v1340
    %v1390 = vadd.f32 %v1388, %v1259
    %v1391 = vadd.f32 %v1389, %v1363
    %v1392 = vadd.f32 %v1390, %v1294
    %v1393 = vadd.f32 %v1391, %v1386
    %v1394 = vld [vmem:[%s3] sm:$0x1]
    %v1396 = vperm.slane %v1394, 0
    %v1398 = vadd.f32 %v1392, %v1396
    %v1399 = vadd.f32 %v1393, %v1396
    %1400 = vst.msk [vmem:[#allocation2] sm:$0xff] %vm32, %v1398
    %1401 = vst.msk [vmem:[#allocation2 + $0x8] sm:$0xff] %vm32, %v1399
    // Predicated region
    $region18: #{self_attention_packed.1} parent=1 // pred_check
      _
    $region19: #{self_attention_packed.1} parent=1 // pred_check_branch
      %1403 = sbr.rel (0) target = $region21
    $region20: #{self_attention_packed.1} parent=1 // pred_region
      %1405 = vsyncadd [#allocation3], 0
      %s1406 = sshll.u32 [#allocation2], 4
      %s1407 = int_to_ptr.vmem [resolvable:$true] %s1406
      %s1408 = sshll.u32 %s4, 4
      %s1409 = int_to_ptr.hbm [resolvable:$true] %s1408
      %1414 = dma.vmem_to_hbm [thread:$0]  %s1407, 256, %s1409, [#allocation3], 128, 128, 8
    $region21: #{self_attention_packed.1} parent=1 // pred_fallthru
      _
    // Predicated region
    $region22: #{self_attention_packed.1} parent=1 // pred_check
      _
    $region23: #{self_attention_packed.1} parent=1 // pred_check_branch
      %1416 = sbr.rel (0) target = $region25
    $region24: #{self_attention_packed.1} parent=1 // pred_region
      %1418 = dma.done [#allocation3], 256
    $region25: #{self_attention_packed.1} parent=1 // pred_fallthru
      _
    %1419 = vsyncpa [#allocation3], 1

</llo_original>
